<compile_context>
chip_gen: v7x
topology: tpu7x:2x2x1
jax: 0.10.0
libtpu: 0.0.40
codegen_flags: <defaults>
</compile_context>

<pallas_src>
import jax
import jax.numpy as jnp
from jax import lax
from jax.experimental import pallas as pl
from jax.experimental.pallas import tpu as pltpu


def _hardswish(y):
    # x * hardtanh(x + 3, 0, 6) / 6
    return y * jnp.clip(y + 3.0, 0.0, 6.0) * (1.0 / 6.0)


# ---------------------------------------------------------------------------
# Fully fused C2f kernel (one grid step per image)
# ---------------------------------------------------------------------------

def _make_c2f_kernel(n, shortcut, c, H, W):
    HW = H * W

    def conv1x1(x, w_ref, ss_ref):
        """x: (Cin, HW) f32; w_ref: (Cout, Cin); fused BN + Hardswish."""
        y = jnp.dot(w_ref[...], x, preferred_element_type=jnp.float32)
        y = y * ss_ref[:, 0:1] + ss_ref[:, 1:2]
        return _hardswish(y)

    def conv3x3(x, w_ref, ss_ref, mask_l, mask_r, residual=None):
        """3x3 stride-1 'same' conv in CHW orientation.

        x      : (Cin, HW) f32
        w_ref  : (Cout, 9*Cin) im2col weights, col index = (kh*3+kw)*Cin + ci
        The 9 shifted windows are built with static lane shifts of a
        zero-padded copy (row shifts are +/-W lane offsets, column shifts are
        +/-1 with edge-column masks), concatenated into a single (9*Cin, HW)
        operand, and fed to ONE big-K MXU matmul.
        """
        cin = x.shape[0]
        zpad = jnp.zeros((cin, W + 1), jnp.float32)
        xp = jnp.concatenate([zpad, x, zpad], axis=1)        # (Cin, HW + 2W + 2)
        pieces = []
        for kh in range(3):
            for kw in range(3):
                s = (W + 1) + (kh - 1) * W + (kw - 1)
                piece = xp[:, s:s + HW]                      # shifted window
                if kw == 0:                                  # needs x(h', w-1)
                    piece = piece * mask_l                   # zero at w == 0
                elif kw == 2:                                # needs x(h', w+1)
                    piece = piece * mask_r                   # zero at w == W-1
                pieces.append(piece)
        patches = jnp.concatenate(pieces, axis=0)            # (9*Cin, HW)
        y = jnp.dot(w_ref[...], patches, preferred_element_type=jnp.float32)
        y = y * ss_ref[:, 0:1] + ss_ref[:, 1:2]              # fused BN (eval)
        y = _hardswish(y)
        if residual is not None:                             # fused bottleneck add
            y = y + residual
        return y

    def kernel(*refs):
        # refs: x, cv1_w, cv1_ss, [b_i.cv1_w, b_i.cv1_ss, b_i.cv2_w, b_i.cv2_ss]*n,
        #       cv2_w, cv2_ss, o
        x_ref, cv1w_ref, cv1ss_ref = refs[0], refs[1], refs[2]
        m_refs = refs[3:3 + 4 * n]
        cv2w_ref, cv2ss_ref = refs[3 + 4 * n], refs[4 + 4 * n]
        o_ref = refs[5 + 4 * n]

        col = lax.broadcasted_iota(jnp.int32, (1, HW), 1) % W
        mask_l = (col != 0).astype(jnp.float32)
        mask_r = (col != (W - 1)).astype(jnp.float32)

        x = x_ref[0].astype(jnp.float32)                     # (c1, HW)
        y_all = conv1x1(x, cv1w_ref, cv1ss_ref)              # (2c, HW)

        # Channel split (torch .split((c, c), 1)) is pure value slicing.
        pieces = [y_all[:c], y_all[c:]]
        prev = pieces[-1]
        for i in range(n):
            b1w, b1ss, b2w, b2ss = m_refs[4 * i:4 * i + 4]
            t = conv3x3(prev, b1w, b1ss, mask_l, mask_r)
            t = conv3x3(t, b2w, b2ss, mask_l, mask_r,
                        residual=prev if shortcut else None)
            pieces.append(t)
            prev = t

        # torch.cat fused as a VMEM concat feeding one big-K (K=(2+n)c) matmul.
        y_cat = jnp.concatenate(pieces, axis=0)              # ((2+n)c, HW)
        out = conv1x1(y_cat, cv2w_ref, cv2ss_ref)            # (c2, HW)
        o_ref[0] = out.astype(o_ref.dtype)                   # lane-dense store

    return kernel


# ---------------------------------------------------------------------------
# Wrapper
# ---------------------------------------------------------------------------

def _fold_bn(gamma, beta, mean, var, eps):
    scale = gamma.astype(jnp.float32) / jnp.sqrt(var.astype(jnp.float32) + eps)
    shift = beta.astype(jnp.float32) - mean.astype(jnp.float32) * scale
    return jnp.stack([scale, shift], axis=1)                 # (Cout, 2)


def _w_1x1(p):
    w = p['w']                                               # (Cout, Cin, 1, 1)
    return w.reshape(w.shape[0], w.shape[1]).astype(jnp.float32)


def _w_3x3_im2col(p):
    w = p['w']                                               # (Cout, Cin, 3, 3)
    # column index = (kh*3 + kw)*Cin + ci, matching the kernel's patch layout
    return jnp.transpose(w, (0, 2, 3, 1)).reshape(w.shape[0], -1).astype(jnp.float32)


def c2f_forward(x_nchw, params, *, n=1, shortcut=False, eps=1e-5):
    """C2f forward (eval-mode BN).  x_nchw: (N, c1, H, W) f32.  Returns NCHW f32."""
    N, c1, H, W = x_nchw.shape
    HW = H * W
    c = int(params['c'])
    c2 = params['cv2']['w'].shape[0]

    x = x_nchw.reshape(N, c1, HW).astype(jnp.float32)        # NCHW consumed directly

    def fold(p):
        return _fold_bn(p['g'], p['b'], p['m'], p['v'], eps)

    operands = [x, _w_1x1(params['cv1']), fold(params['cv1'])]
    for i in range(n):
        bp = params['m'][i]
        operands += [_w_3x3_im2col(bp['cv1']), fold(bp['cv1']),
                     _w_3x3_im2col(bp['cv2']), fold(bp['cv2'])]
    operands += [_w_1x1(params['cv2']), fold(params['cv2'])]

    in_specs = [pl.BlockSpec((1, c1, HW), lambda b: (b, 0, 0))]
    for op in operands[1:]:
        # Weights / folded-BN tables: same (whole-array) block every grid step,
        # so the pipeline keeps them resident instead of re-DMAing per image.
        in_specs.append(pl.BlockSpec(op.shape, lambda b: (0, 0)))

    flops = 2 * N * HW * (c1 * 2 * c + n * 2 * 9 * c * c + (2 + n) * c * c2)
    bytes_accessed = 4 * (sum(int(op.size) for op in operands) + N * c2 * HW)

    out = pl.pallas_call(
        _make_c2f_kernel(n=n, shortcut=shortcut, c=c, H=H, W=W),
        out_shape=jax.ShapeDtypeStruct((N, c2, HW), jnp.float32),
        grid_spec=pltpu.PrefetchScalarGridSpec(
            num_scalar_prefetch=0,
            grid=(N,),
            in_specs=in_specs,
            out_specs=pl.BlockSpec((1, c2, HW), lambda b: (b, 0, 0))),
        compiler_params=pltpu.CompilerParams(dimension_semantics=("parallel",)),
        cost_estimate=pl.CostEstimate(flops=int(flops), transcendentals=0,
                                      bytes_accessed=int(bytes_accessed)),
    )(*operands)
    return out.reshape(N, c2, H, W)                          # already NCHW order


# ---------------------------------------------------------------------------
# Pure-JAX reference (f32 throughout, mirrors the kernel's numerics)
# ---------------------------------------------------------------------------

def _reference_c2f(x, params, *, n=1, shortcut=False, eps=1e-5):
    def conv(xa, p, k):
        pad = k // 2
        y = lax.conv_general_dilated(xa, p['w'], (1, 1), ((pad, pad), (pad, pad)),
                                     dimension_numbers=("NCHW", "OIHW", "NCHW"))
        scale = p['g'] / jnp.sqrt(p['v'] + eps)
        shift = p['b'] - p['m'] * scale
        y = y * scale[None, :, None, None] + shift[None, :, None, None]
        return y * jnp.clip(y + 3.0, 0.0, 6.0) * (1.0 / 6.0)

    c = int(params['c'])
    y_all = conv(x, params['cv1'], 1)
    ys = [y_all[:, :c], y_all[:, c:]]
    for i in range(n):
        t = conv(ys[-1], params['m'][i]['cv1'], 3)
        t = conv(t, params['m'][i]['cv2'], 3)
        if shortcut:
            t = t + ys[-1]
        ys.append(t)
    return conv(jnp.concatenate(ys, axis=1), params['cv2'], 1)


# ---------------------------------------------------------------------------
# Self-test
# ---------------------------------------------------------------------------

if __name__ == "__main__":
    key = jax.random.PRNGKey(0)

    def make_conv_params(k, cin, cout, ksize):
        kw_, kg, kb, km, kv = jax.random.split(k, 5)
        return dict(
            w=0.3 * jax.random.normal(kw_, (cout, cin, ksize, ksize), jnp.float32),
            g=1.0 + 0.1 * jax.random.normal(kg, (cout,), jnp.float32),
            b=0.1 * jax.random.normal(kb, (cout,), jnp.float32),
            m=0.1 * jax.random.normal(km, (cout,), jnp.float32),
            v=jnp.abs(1.0 + 0.1 * jax.random.normal(kv, (cout,), jnp.float32)),
        )

    def make_c2f_params(k, c1, c2, n, e=0.5):
        c = int(c2 * e)
        ks = jax.random.split(k, 2 + 2 * n)
        return dict(
            c=c,
            cv1=make_conv_params(ks[0], c1, 2 * c, 1),
            cv2=make_conv_params(ks[1], (2 + n) * c, c2, 1),
            m=[dict(cv1=make_conv_params(ks[2 + 2 * i], c, c, 3),
                    cv2=make_conv_params(ks[3 + 2 * i], c, c, 3))
               for i in range(n)],
        )

    cases = [
        dict(N=2, c1=4, c2=8, H=16, W=16, n=1, shortcut=False),   # C2f defaults
        dict(N=1, c1=4, c2=8, H=16, W=16, n=2, shortcut=True),    # multi-block + residual
    ]
    for cs in cases:
        kx, kp, key = jax.random.split(key, 3)
        x = jax.random.normal(kx, (cs['N'], cs['c1'], cs['H'], cs['W']), jnp.float32)
        params = make_c2f_params(kp, cs['c1'], cs['c2'], cs['n'])

        out = c2f_forward(x, params, n=cs['n'], shortcut=cs['shortcut'])
        out = jax.block_until_ready(out)

        ref = _reference_c2f(x, params, n=cs['n'], shortcut=cs['shortcut'])
        assert out.shape == (cs['N'], cs['c2'], cs['H'], cs['W']), out.shape
        err = float(jnp.max(jnp.abs(out - ref)))
        assert jnp.allclose(out, ref, atol=2e-3, rtol=2e-2), (
            f"max abs err {err} for case {cs}")

    print("KERNEL_OK")
</pallas_src>

<mosaic_0001>
module attributes {stable_mosaic.version = 11 : i64} {
  func.func @kernel(%arg0: i32, %arg1: memref<1x4x256xf32, #tpu.memory_space<vmem>>, %arg2: memref<8x4xf32, #tpu.memory_space<vmem>>, %arg3: memref<8x2xf32, #tpu.memory_space<vmem>>, %arg4: memref<4x36xf32, #tpu.memory_space<vmem>>, %arg5: memref<4x2xf32, #tpu.memory_space<vmem>>, %arg6: memref<4x36xf32, #tpu.memory_space<vmem>>, %arg7: memref<4x2xf32, #tpu.memory_space<vmem>>, %arg8: memref<8x12xf32, #tpu.memory_space<vmem>>, %arg9: memref<8x2xf32, #tpu.memory_space<vmem>>, %arg10: memref<1x8x256xf32, #tpu.memory_space<vmem>>) attributes {dimension_semantics = [#tpu.dimension_semantics<parallel>], iteration_bounds = array<i64: 2>, scalar_prefetch = 0 : i64, scratch_operands = 0 : i64, tpu.core_type = #tpu.core_type<tc>, window_params = [{transform_indices = @transform_0, window_bounds = array<i64: 1, 4, 256>}, {pipeline_mode = #tpu.pipeline_mode<synchronous>, transform_indices = @transform_1, window_bounds = array<i64: 8, 4>}, {pipeline_mode = #tpu.pipeline_mode<synchronous>, transform_indices = @transform_2, window_bounds = array<i64: 8, 2>}, {pipeline_mode = #tpu.pipeline_mode<synchronous>, transform_indices = @transform_3, window_bounds = array<i64: 4, 36>}, {pipeline_mode = #tpu.pipeline_mode<synchronous>, transform_indices = @transform_4, window_bounds = array<i64: 4, 2>}, {pipeline_mode = #tpu.pipeline_mode<synchronous>, transform_indices = @transform_5, window_bounds = array<i64: 4, 36>}, {pipeline_mode = #tpu.pipeline_mode<synchronous>, transform_indices = @transform_6, window_bounds = array<i64: 4, 2>}, {pipeline_mode = #tpu.pipeline_mode<synchronous>, transform_indices = @transform_7, window_bounds = array<i64: 8, 12>}, {pipeline_mode = #tpu.pipeline_mode<synchronous>, transform_indices = @transform_8, window_bounds = array<i64: 8, 2>}, {transform_indices = @transform_9, window_bounds = array<i64: 1, 8, 256>}]} {
    %0 = tpu.iota {dimensions = array<i32: 1>} : vector<1x256xi32>
    %c16_i32 = arith.constant 16 : i32
    %c0_i32 = arith.constant 0 : i32
    %1 = arith.cmpi eq, %c16_i32, %c0_i32 : i32
    %c1_i32 = arith.constant 1 : i32
    %2 = arith.select %1, %c1_i32, %c16_i32 : i32
    %3 = vector.broadcast %2 : i32 to vector<1x256xi32>
    %4 = arith.remsi %0, %3 : vector<1x256xi32>
    %c0_i32_0 = arith.constant 0 : i32
    %5 = vector.broadcast %c0_i32_0 : i32 to vector<1x256xi32>
    %6 = arith.cmpi ne, %4, %5 : vector<1x256xi32>
    %c0_i32_1 = arith.constant 0 : i32
    %7 = vector.broadcast %c0_i32_1 : i32 to vector<1x256xi32>
    %8 = arith.cmpi slt, %4, %7 : vector<1x256xi32>
    %c0_i32_2 = arith.constant 0 : i32
    %9 = arith.cmpi slt, %2, %c0_i32_2 : i32
    %10 = vector.broadcast %9 : i1 to vector<1x256xi1>
    %11 = vector.broadcast %10 : vector<1x256xi1> to vector<1x256xi1>
    %12 = arith.xori %8, %11 : vector<1x256xi1>
    %13 = arith.andi %12, %6 : vector<1x256xi1>
    %14 = vector.broadcast %2 : i32 to vector<1x256xi32>
    %15 = arith.addi %4, %14 : vector<1x256xi32>
    %16 = arith.select %13, %15, %4 : vector<1x256xi1>, vector<1x256xi32>
    %c0_i32_3 = arith.constant 0 : i32
    %17 = vector.broadcast %c0_i32_3 : i32 to vector<1x256xi32>
    %18 = arith.cmpi ne, %16, %17 : vector<1x256xi32>
    %19 = arith.extui %18 : vector<1x256xi1> to vector<1x256xi32>
    %20 = arith.sitofp %19 : vector<1x256xi32> to vector<1x256xf32>
    %c15_i32 = arith.constant 15 : i32
    %21 = vector.broadcast %c15_i32 : i32 to vector<1x256xi32>
    %22 = arith.cmpi ne, %16, %21 : vector<1x256xi32>
    %23 = arith.extui %22 : vector<1x256xi1> to vector<1x256xi32>
    %24 = arith.sitofp %23 : vector<1x256xi32> to vector<1x256xf32>
    %c0 = arith.constant 0 : index
    %c0_4 = arith.constant 0 : index
    %c0_5 = arith.constant 0 : index
    %25 = vector.load %arg1[%c0, %c0_4, %c0_5] : memref<1x4x256xf32, #tpu.memory_space<vmem>>, vector<1x4x256xf32>
    %26 = vector.shape_cast %25 : vector<1x4x256xf32> to vector<4x256xf32>
    %c0_6 = arith.constant 0 : index
    %c0_7 = arith.constant 0 : index
    %27 = vector.load %arg2[%c0_6, %c0_7] : memref<8x4xf32, #tpu.memory_space<vmem>>, vector<8x4xf32>
    %cst = arith.constant dense<0.000000e+00> : vector<8x256xf32>
    %28 = tpu.matmul %27, %26, %cst {dimension_numbers = #tpu.dot_dimension_numbers<[1], [0], [0], [1], [0, 0, 1, 1], [], []>} : vector<8x4xf32>, vector<4x256xf32>, vector<8x256xf32> -> vector<8x256xf32>
    %c0_8 = arith.constant 0 : index
    %c0_9 = arith.constant 0 : index
    %29 = vector.load %arg3[%c0_8, %c0_9] : memref<8x2xf32, #tpu.memory_space<vmem>>, vector<8x1xf32>
    %30 = vector.broadcast %29 : vector<8x1xf32> to vector<8x256xf32>
    %31 = arith.mulf %28, %30 : vector<8x256xf32>
    %c0_10 = arith.constant 0 : index
    %c1 = arith.constant 1 : index
    %32 = vector.load %arg3[%c0_10, %c1] : memref<8x2xf32, #tpu.memory_space<vmem>>, vector<8x1xf32>
    %33 = vector.broadcast %32 : vector<8x1xf32> to vector<8x256xf32>
    %34 = arith.addf %31, %33 : vector<8x256xf32>
    %cst_11 = arith.constant 3.000000e+00 : f32
    %35 = vector.broadcast %cst_11 : f32 to vector<8x256xf32>
    %36 = arith.addf %34, %35 : vector<8x256xf32>
    %cst_12 = arith.constant 0.000000e+00 : f32
    %cst_13 = arith.constant 6.000000e+00 : f32
    %37 = vector.broadcast %cst_12 : f32 to vector<8x256xf32>
    %38 = arith.maximumf %37, %36 : vector<8x256xf32>
    %39 = vector.broadcast %cst_13 : f32 to vector<8x256xf32>
    %40 = arith.minimumf %39, %38 : vector<8x256xf32>
    %41 = arith.mulf %34, %40 : vector<8x256xf32>
    %cst_14 = arith.constant 0.166666672 : f32
    %42 = vector.broadcast %cst_14 : f32 to vector<8x256xf32>
    %43 = arith.mulf %41, %42 : vector<8x256xf32>
    %44 = vector.extract_strided_slice %43 {offsets = [0, 0], sizes = [4, 256], strides = [1, 1]} : vector<8x256xf32> to vector<4x256xf32>
    %45 = vector.extract_strided_slice %43 {offsets = [4, 0], sizes = [4, 256], strides = [1, 1]} : vector<8x256xf32> to vector<4x256xf32>
    %cst_15 = arith.constant 0.000000e+00 : f32
    %46 = vector.broadcast %cst_15 : f32 to vector<4x17xf32>
    %47 = tpu.concatenate %46, %45, %46 in 1 : vector<4x17xf32>, vector<4x256xf32>, vector<4x17xf32> -> vector<4x290xf32>
    %48 = vector.extract_strided_slice %47 {offsets = [0, 0], sizes = [4, 256], strides = [1, 1]} : vector<4x290xf32> to vector<4x256xf32>
    %49 = vector.broadcast %20 : vector<1x256xf32> to vector<4x256xf32>
    %50 = arith.mulf %48, %49 : vector<4x256xf32>
    %51 = vector.extract_strided_slice %47 {offsets = [0, 1], sizes = [4, 256], strides = [1, 1]} : vector<4x290xf32> to vector<4x256xf32>
    %52 = vector.extract_strided_slice %47 {offsets = [0, 2], sizes = [4, 256], strides = [1, 1]} : vector<4x290xf32> to vector<4x256xf32>
    %53 = vector.broadcast %24 : vector<1x256xf32> to vector<4x256xf32>
    %54 = arith.mulf %52, %53 : vector<4x256xf32>
    %55 = vector.extract_strided_slice %47 {offsets = [0, 16], sizes = [4, 256], strides = [1, 1]} : vector<4x290xf32> to vector<4x256xf32>
    %56 = vector.broadcast %20 : vector<1x256xf32> to vector<4x256xf32>
    %57 = arith.mulf %55, %56 : vector<4x256xf32>
    %58 = vector.extract_strided_slice %47 {offsets = [0, 17], sizes = [4, 256], strides = [1, 1]} : vector<4x290xf32> to vector<4x256xf32>
    %59 = vector.extract_strided_slice %47 {offsets = [0, 18], sizes = [4, 256], strides = [1, 1]} : vector<4x290xf32> to vector<4x256xf32>
    %60 = vector.broadcast %24 : vector<1x256xf32> to vector<4x256xf32>
    %61 = arith.mulf %59, %60 : vector<4x256xf32>
    %62 = vector.extract_strided_slice %47 {offsets = [0, 32], sizes = [4, 256], strides = [1, 1]} : vector<4x290xf32> to vector<4x256xf32>
    %63 = vector.broadcast %20 : vector<1x256xf32> to vector<4x256xf32>
    %64 = arith.mulf %62, %63 : vector<4x256xf32>
    %65 = vector.extract_strided_slice %47 {offsets = [0, 33], sizes = [4, 256], strides = [1, 1]} : vector<4x290xf32> to vector<4x256xf32>
    %66 = vector.extract_strided_slice %47 {offsets = [0, 34], sizes = [4, 256], strides = [1, 1]} : vector<4x290xf32> to vector<4x256xf32>
    %67 = vector.broadcast %24 : vector<1x256xf32> to vector<4x256xf32>
    %68 = arith.mulf %66, %67 : vector<4x256xf32>
    %69 = tpu.concatenate %50, %51, %54, %57, %58, %61, %64, %65, %68 in 0 : vector<4x256xf32>, vector<4x256xf32>, vector<4x256xf32>, vector<4x256xf32>, vector<4x256xf32>, vector<4x256xf32>, vector<4x256xf32>, vector<4x256xf32>, vector<4x256xf32> -> vector<36x256xf32>
    %c0_16 = arith.constant 0 : index
    %c0_17 = arith.constant 0 : index
    %70 = vector.load %arg4[%c0_16, %c0_17] : memref<4x36xf32, #tpu.memory_space<vmem>>, vector<4x36xf32>
    %cst_18 = arith.constant dense<0.000000e+00> : vector<4x256xf32>
    %71 = tpu.matmul %70, %69, %cst_18 {dimension_numbers = #tpu.dot_dimension_numbers<[1], [0], [0], [1], [0, 0, 1, 1], [], []>} : vector<4x36xf32>, vector<36x256xf32>, vector<4x256xf32> -> vector<4x256xf32>
    %c0_19 = arith.constant 0 : index
    %c0_20 = arith.constant 0 : index
    %72 = vector.load %arg5[%c0_19, %c0_20] : memref<4x2xf32, #tpu.memory_space<vmem>>, vector<4x1xf32>
    %73 = vector.broadcast %72 : vector<4x1xf32> to vector<4x256xf32>
    %74 = arith.mulf %71, %73 : vector<4x256xf32>
    %c0_21 = arith.constant 0 : index
    %c1_22 = arith.constant 1 : index
    %75 = vector.load %arg5[%c0_21, %c1_22] : memref<4x2xf32, #tpu.memory_space<vmem>>, vector<4x1xf32>
    %76 = vector.broadcast %75 : vector<4x1xf32> to vector<4x256xf32>
    %77 = arith.addf %74, %76 : vector<4x256xf32>
    %cst_23 = arith.constant 3.000000e+00 : f32
    %78 = vector.broadcast %cst_23 : f32 to vector<4x256xf32>
    %79 = arith.addf %77, %78 : vector<4x256xf32>
    %cst_24 = arith.constant 0.000000e+00 : f32
    %cst_25 = arith.constant 6.000000e+00 : f32
    %80 = vector.broadcast %cst_24 : f32 to vector<4x256xf32>
    %81 = arith.maximumf %80, %79 : vector<4x256xf32>
    %82 = vector.broadcast %cst_25 : f32 to vector<4x256xf32>
    %83 = arith.minimumf %82, %81 : vector<4x256xf32>
    %84 = arith.mulf %77, %83 : vector<4x256xf32>
    %cst_26 = arith.constant 0.166666672 : f32
    %85 = vector.broadcast %cst_26 : f32 to vector<4x256xf32>
    %86 = arith.mulf %84, %85 : vector<4x256xf32>
    %cst_27 = arith.constant 0.000000e+00 : f32
    %87 = vector.broadcast %cst_27 : f32 to vector<4x17xf32>
    %88 = tpu.concatenate %87, %86, %87 in 1 : vector<4x17xf32>, vector<4x256xf32>, vector<4x17xf32> -> vector<4x290xf32>
    %89 = vector.extract_strided_slice %88 {offsets = [0, 0], sizes = [4, 256], strides = [1, 1]} : vector<4x290xf32> to vector<4x256xf32>
    %90 = vector.broadcast %20 : vector<1x256xf32> to vector<4x256xf32>
    %91 = arith.mulf %89, %90 : vector<4x256xf32>
    %92 = vector.extract_strided_slice %88 {offsets = [0, 1], sizes = [4, 256], strides = [1, 1]} : vector<4x290xf32> to vector<4x256xf32>
    %93 = vector.extract_strided_slice %88 {offsets = [0, 2], sizes = [4, 256], strides = [1, 1]} : vector<4x290xf32> to vector<4x256xf32>
    %94 = vector.broadcast %24 : vector<1x256xf32> to vector<4x256xf32>
    %95 = arith.mulf %93, %94 : vector<4x256xf32>
    %96 = vector.extract_strided_slice %88 {offsets = [0, 16], sizes = [4, 256], strides = [1, 1]} : vector<4x290xf32> to vector<4x256xf32>
    %97 = vector.broadcast %20 : vector<1x256xf32> to vector<4x256xf32>
    %98 = arith.mulf %96, %97 : vector<4x256xf32>
    %99 = vector.extract_strided_slice %88 {offsets = [0, 17], sizes = [4, 256], strides = [1, 1]} : vector<4x290xf32> to vector<4x256xf32>
    %100 = vector.extract_strided_slice %88 {offsets = [0, 18], sizes = [4, 256], strides = [1, 1]} : vector<4x290xf32> to vector<4x256xf32>
    %101 = vector.broadcast %24 : vector<1x256xf32> to vector<4x256xf32>
    %102 = arith.mulf %100, %101 : vector<4x256xf32>
    %103 = vector.extract_strided_slice %88 {offsets = [0, 32], sizes = [4, 256], strides = [1, 1]} : vector<4x290xf32> to vector<4x256xf32>
    %104 = vector.broadcast %20 : vector<1x256xf32> to vector<4x256xf32>
    %105 = arith.mulf %103, %104 : vector<4x256xf32>
    %106 = vector.extract_strided_slice %88 {offsets = [0, 33], sizes = [4, 256], strides = [1, 1]} : vector<4x290xf32> to vector<4x256xf32>
    %107 = vector.extract_strided_slice %88 {offsets = [0, 34], sizes = [4, 256], strides = [1, 1]} : vector<4x290xf32> to vector<4x256xf32>
    %108 = vector.broadcast %24 : vector<1x256xf32> to vector<4x256xf32>
    %109 = arith.mulf %107, %108 : vector<4x256xf32>
    %110 = tpu.concatenate %91, %92, %95, %98, %99, %102, %105, %106, %109 in 0 : vector<4x256xf32>, vector<4x256xf32>, vector<4x256xf32>, vector<4x256xf32>, vector<4x256xf32>, vector<4x256xf32>, vector<4x256xf32>, vector<4x256xf32>, vector<4x256xf32> -> vector<36x256xf32>
    %c0_28 = arith.constant 0 : index
    %c0_29 = arith.constant 0 : index
    %111 = vector.load %arg6[%c0_28, %c0_29] : memref<4x36xf32, #tpu.memory_space<vmem>>, vector<4x36xf32>
    %cst_30 = arith.constant dense<0.000000e+00> : vector<4x256xf32>
    %112 = tpu.matmul %111, %110, %cst_30 {dimension_numbers = #tpu.dot_dimension_numbers<[1], [0], [0], [1], [0, 0, 1, 1], [], []>} : vector<4x36xf32>, vector<36x256xf32>, vector<4x256xf32> -> vector<4x256xf32>
    %c0_31 = arith.constant 0 : index
    %c0_32 = arith.constant 0 : index
    %113 = vector.load %arg7[%c0_31, %c0_32] : memref<4x2xf32, #tpu.memory_space<vmem>>, vector<4x1xf32>
    %114 = vector.broadcast %113 : vector<4x1xf32> to vector<4x256xf32>
    %115 = arith.mulf %112, %114 : vector<4x256xf32>
    %c0_33 = arith.constant 0 : index
    %c1_34 = arith.constant 1 : index
    %116 = vector.load %arg7[%c0_33, %c1_34] : memref<4x2xf32, #tpu.memory_space<vmem>>, vector<4x1xf32>
    %117 = vector.broadcast %116 : vector<4x1xf32> to vector<4x256xf32>
    %118 = arith.addf %115, %117 : vector<4x256xf32>
    %cst_35 = arith.constant 3.000000e+00 : f32
    %119 = vector.broadcast %cst_35 : f32 to vector<4x256xf32>
    %120 = arith.addf %118, %119 : vector<4x256xf32>
    %cst_36 = arith.constant 0.000000e+00 : f32
    %cst_37 = arith.constant 6.000000e+00 : f32
    %121 = vector.broadcast %cst_36 : f32 to vector<4x256xf32>
    %122 = arith.maximumf %121, %120 : vector<4x256xf32>
    %123 = vector.broadcast %cst_37 : f32 to vector<4x256xf32>
    %124 = arith.minimumf %123, %122 : vector<4x256xf32>
    %125 = arith.mulf %118, %124 : vector<4x256xf32>
    %cst_38 = arith.constant 0.166666672 : f32
    %126 = vector.broadcast %cst_38 : f32 to vector<4x256xf32>
    %127 = arith.mulf %125, %126 : vector<4x256xf32>
    %128 = tpu.concatenate %44, %45, %127 in 0 : vector<4x256xf32>, vector<4x256xf32>, vector<4x256xf32> -> vector<12x256xf32>
    %c0_39 = arith.constant 0 : index
    %c0_40 = arith.constant 0 : index
    %129 = vector.load %arg8[%c0_39, %c0_40] : memref<8x12xf32, #tpu.memory_space<vmem>>, vector<8x12xf32>
    %cst_41 = arith.constant dense<0.000000e+00> : vector<8x256xf32>
    %130 = tpu.matmul %129, %128, %cst_41 {dimension_numbers = #tpu.dot_dimension_numbers<[1], [0], [0], [1], [0, 0, 1, 1], [], []>} : vector<8x12xf32>, vector<12x256xf32>, vector<8x256xf32> -> vector<8x256xf32>
    %c0_42 = arith.constant 0 : index
    %c0_43 = arith.constant 0 : index
    %131 = vector.load %arg9[%c0_42, %c0_43] : memref<8x2xf32, #tpu.memory_space<vmem>>, vector<8x1xf32>
    %132 = vector.broadcast %131 : vector<8x1xf32> to vector<8x256xf32>
    %133 = arith.mulf %130, %132 : vector<8x256xf32>
    %c0_44 = arith.constant 0 : index
    %c1_45 = arith.constant 1 : index
    %134 = vector.load %arg9[%c0_44, %c1_45] : memref<8x2xf32, #tpu.memory_space<vmem>>, vector<8x1xf32>
    %135 = vector.broadcast %134 : vector<8x1xf32> to vector<8x256xf32>
    %136 = arith.addf %133, %135 : vector<8x256xf32>
    %cst_46 = arith.constant 3.000000e+00 : f32
    %137 = vector.broadcast %cst_46 : f32 to vector<8x256xf32>
    %138 = arith.addf %136, %137 : vector<8x256xf32>
    %cst_47 = arith.constant 0.000000e+00 : f32
    %cst_48 = arith.constant 6.000000e+00 : f32
    %139 = vector.broadcast %cst_47 : f32 to vector<8x256xf32>
    %140 = arith.maximumf %139, %138 : vector<8x256xf32>
    %141 = vector.broadcast %cst_48 : f32 to vector<8x256xf32>
    %142 = arith.minimumf %141, %140 : vector<8x256xf32>
    %143 = arith.mulf %136, %142 : vector<8x256xf32>
    %cst_49 = arith.constant 0.166666672 : f32
    %144 = vector.broadcast %cst_49 : f32 to vector<8x256xf32>
    %145 = arith.mulf %143, %144 : vector<8x256xf32>
    %c0_50 = arith.constant 0 : index
    %c0_51 = arith.constant 0 : index
    %c0_52 = arith.constant 0 : index
    %146 = vector.load %arg10[%c0_50, %c0_51, %c0_52] : memref<1x8x256xf32, #tpu.memory_space<vmem>>, vector<1x8x256xf32>
    %147 = vector.shape_cast %146 : vector<1x8x256xf32> to vector<8x256xf32>
    %148 = vector.shape_cast %145 : vector<8x256xf32> to vector<1x8x256xf32>
    tpu.vector_store %arg10[%c0_50, %c0_51, %c0_52], %148 {strides = array<i32>} : memref<1x8x256xf32, #tpu.memory_space<vmem>>, vector<1x8x256xf32>,
    return
  }
  func.func @transform_0(%arg0: i32) -> (i32, i32, i32) {
    %c0_i32 = arith.constant 0 : i32
    %c0_i32_0 = arith.constant 0 : i32
    %c0_i32_1 = arith.constant 0 : i32
    return %arg0, %c0_i32, %c0_i32_0 : i32, i32, i32
  }
  func.func @transform_1(%arg0: i32) -> (i32, i32) {
    %c0_i32 = arith.constant 0 : i32
    %c0_i32_0 = arith.constant 0 : i32
    %c0_i32_1 = arith.constant 0 : i32
    return %c0_i32, %c0_i32_0 : i32, i32
  }
  func.func @transform_2(%arg0: i32) -> (i32, i32) {
    %c0_i32 = arith.constant 0 : i32
    %c0_i32_0 = arith.constant 0 : i32
    %c0_i32_1 = arith.constant 0 : i32
    return %c0_i32, %c0_i32_0 : i32, i32
  }
  func.func @transform_3(%arg0: i32) -> (i32, i32) {
    %c0_i32 = arith.constant 0 : i32
    %c0_i32_0 = arith.constant 0 : i32
    %c0_i32_1 = arith.constant 0 : i32
    return %c0_i32, %c0_i32_0 : i32, i32
  }
  func.func @transform_4(%arg0: i32) -> (i32, i32) {
    %c0_i32 = arith.constant 0 : i32
    %c0_i32_0 = arith.constant 0 : i32
    %c0_i32_1 = arith.constant 0 : i32
    return %c0_i32, %c0_i32_0 : i32, i32
  }
  func.func @transform_5(%arg0: i32) -> (i32, i32) {
    %c0_i32 = arith.constant 0 : i32
    %c0_i32_0 = arith.constant 0 : i32
    %c0_i32_1 = arith.constant 0 : i32
    return %c0_i32, %c0_i32_0 : i32, i32
  }
  func.func @transform_6(%arg0: i32) -> (i32, i32) {
    %c0_i32 = arith.constant 0 : i32
    %c0_i32_0 = arith.constant 0 : i32
    %c0_i32_1 = arith.constant 0 : i32
    return %c0_i32, %c0_i32_0 : i32, i32
  }
  func.func @transform_7(%arg0: i32) -> (i32, i32) {
    %c0_i32 = arith.constant 0 : i32
    %c0_i32_0 = arith.constant 0 : i32
    %c0_i32_1 = arith.constant 0 : i32
    return %c0_i32, %c0_i32_0 : i32, i32
  }
  func.func @transform_8(%arg0: i32) -> (i32, i32) {
    %c0_i32 = arith.constant 0 : i32
    %c0_i32_0 = arith.constant 0 : i32
    %c0_i32_1 = arith.constant 0 : i32
    return %c0_i32, %c0_i32_0 : i32, i32
  }
  func.func @transform_9(%arg0: i32) -> (i32, i32, i32) {
    %c0_i32 = arith.constant 0 : i32
    %c0_i32_0 = arith.constant 0 : i32
    %c0_i32_1 = arith.constant 0 : i32
    return %arg0, %c0_i32, %c0_i32_0 : i32, i32, i32
  }
}

</mosaic_0001>

<llo_original>
// kernel: tpu_custom_call.1
$region0: #{tpu_custom_call.1}
  #allocation0 [shape = 'u32[]', space=smem, size = 0x4, offset = 0x4, fixed_abs, tag = 'smem constant byte address 0x4 - core index']
  #allocation1 [shape = 'u32[144,128]{1,0:T(1,128)}', space=vmem, size = 0x12000, scoped, tag = 'internal scratch']
  %s0 = inlined_call_operand.vmem [shape: f32[2,4,256], index: 0, kind: input, shape index: {}]
  %s1 = inlined_call_operand.vmem [shape: f32[8,4], index: 1, kind: input, shape index: {}]
  %s2 = inlined_call_operand.vmem [shape: f32[8,2], index: 2, kind: input, shape index: {}]
  %s3 = inlined_call_operand.vmem [shape: f32[4,36], index: 3, kind: input, shape index: {}]
  %s4 = inlined_call_operand.vmem [shape: f32[4,2], index: 4, kind: input, shape index: {}]
  %s5 = inlined_call_operand.vmem [shape: f32[4,36], index: 5, kind: input, shape index: {}]
  %s6 = inlined_call_operand.vmem [shape: f32[4,2], index: 6, kind: input, shape index: {}]
  %s7 = inlined_call_operand.vmem [shape: f32[8,12], index: 7, kind: input, shape index: {}]
  %s8 = inlined_call_operand.vmem [shape: f32[8,2], index: 8, kind: input, shape index: {}]
  %s9 = inlined_call_operand.hbm [shape: f32[2,8,256], index: 9, kind: output, shape index: {}]
  %s10 = sld [smem:[#allocation0]]
  $region69: #{tpu_custom_call.1} parent=0
    _
  %s12 = ssub.s32 1, %s10
  %s13 = scalar_select 0, %s12, %s10
  $region1: #{tpu_custom_call.1} parent=0
    #allocation2 [shape = 'u8[16384]{0}', space=vmem, size = 0x4000, scoped, tag = 'output window, operand 0']
    #allocation3 [shape = 's32[2]{0}', space=sflag, size = 0x8, scoped, tag = 'scoped memory for tpu_custom_call.1']
    %14 = vsyncpa [#allocation3], 0
    %s15 = scalar_lea.sflag [#allocation3], 1
    %16 = vsyncpa %s15, 0
    loop: start=0, step=1, limit=4
    $region2: #{tpu_custom_call.1} parent=1 // loop_pre_header
      _
    $region3: #{tpu_custom_call.1} parent=1 // loop_header
      %s18 = sphi 0, %s22
      %p19 = scmp.ge.s32.totalorder %s18, 4
      %s28 = sphi 0, %s30
      %s31 = sphi 0, %s28
      %s32 = sphi 0, %s31
      %s48 = sphi 0, %s32
      %s52 = sphi 0, %s52
      %s54 = sphi 0, %s52
      %s55 = sphi 0, %s54
      %s69 = sphi 0, %s55
      %s73 = sphi 0, %s73
      %s75 = sphi 0, %s73
      %s76 = sphi 0, %s75
      %s90 = sphi 0, %s76
      %s94 = sphi 0, %s94
      %s96 = sphi 0, %s94
      %s97 = sphi 0, %s96
      %s111 = sphi 0, %s97
      %s115 = sphi 0, %s115
      %s117 = sphi 0, %s115
      %s118 = sphi 0, %s117
      %s132 = sphi 0, %s118
      %s136 = sphi 0, %s136
      %s138 = sphi 0, %s136
      %s139 = sphi 0, %s138
      %s153 = sphi 0, %s139
      %s157 = sphi 0, %s157
      %s159 = sphi 0, %s157
      %s160 = sphi 0, %s159
      %s174 = sphi 0, %s160
      %s178 = sphi 0, %s178
      %s180 = sphi 0, %s178
      %s181 = sphi 0, %s180
      %s195 = sphi 0, %s181
      %s199 = sphi 0, %s199
      %s201 = sphi 0, %s199
      %s202 = sphi 0, %s201
      %s216 = sphi 0, %s202
      %s222 = sphi 0, %s224
      %s225 = sphi 0, %s222
      %s226 = sphi 0, %s225
      %s242 = sphi 0, %s226
    $region4: #{tpu_custom_call.1} parent=1 // loop_header_branch
      %21 = sbr.rel (%p19) target = $region8
    $region5: #{tpu_custom_call.1} parent=1 // loop_body
      %s23 = ssub.s32 %s18, 1
      %s24 = ssub.s32 %s18, 2
      %s25 = sadd.s32 %s18, 1
      %s26 = ssub.s32 %s18, %s25
      %p27 = scmp.eq.s32.totalorder %s26, 0
      %s29 = sadd.s32 %s28, 1
      %s30 = scalar_select %p27, %s28, %s29
      %p33 = pneg %p27
      %p34 = scmp.eq.s32.totalorder %s18, 1
      %p35 = por %p33, %p34
      %p36 = scmp.ne.s32.totalorder %s28, %s31
      %p37 = scmp.eq.s32.totalorder %s18, 0
      %p38 = por %p36, %p37
      %p39 = scmp.ne.s32.totalorder %s28, %s31
      %p40 = scmp.eq.s32.totalorder %s23, 1
      %p41 = por %p39, %p40
      %p42 = scmp.ne.s32.totalorder %s31, %s32
      %p43 = scmp.eq.s32.totalorder %s23, 0
      %p44 = por %p42, %p43
      %p45 = scmp.ne.s32.totalorder %s31, %s32
      %p46 = scmp.eq.s32.totalorder %s24, 1
      %p47 = por %p45, %p46
      %p49 = scmp.ne.s32.totalorder %s32, %s48
      %p50 = scmp.eq.s32.totalorder %s24, 0
      %p51 = por %p49, %p50
      %s53 = sadd.s32 %s52, 1
      %p56 = scmp.eq.s32.totalorder %s18, 1
      %p57 = scmp.ne.s32.totalorder %s52, %s54
      %p58 = scmp.eq.s32.totalorder %s18, 0
      %p59 = por %p57, %p58
      %p60 = scmp.ne.s32.totalorder %s52, %s54
      %p61 = scmp.eq.s32.totalorder %s23, 1
      %p62 = por %p60, %p61
      %p63 = scmp.ne.s32.totalorder %s54, %s55
      %p64 = scmp.eq.s32.totalorder %s23, 0
      %p65 = por %p63, %p64
      %p66 = scmp.ne.s32.totalorder %s54, %s55
      %p67 = scmp.eq.s32.totalorder %s24, 1
      %p68 = por %p66, %p67
      %p70 = scmp.ne.s32.totalorder %s55, %s69
      %p71 = scmp.eq.s32.totalorder %s24, 0
      %p72 = por %p70, %p71
      %s74 = sadd.s32 %s73, 1
      %p77 = scmp.eq.s32.totalorder %s18, 1
      %p78 = scmp.ne.s32.totalorder %s73, %s75
      %p79 = scmp.eq.s32.totalorder %s18, 0
      %p80 = por %p78, %p79
      %p81 = scmp.ne.s32.totalorder %s73, %s75
      %p82 = scmp.eq.s32.totalorder %s23, 1
      %p83 = por %p81, %p82
      %p84 = scmp.ne.s32.totalorder %s75, %s76
      %p85 = scmp.eq.s32.totalorder %s23, 0
      %p86 = por %p84, %p85
      %p87 = scmp.ne.s32.totalorder %s75, %s76
      %p88 = scmp.eq.s32.totalorder %s24, 1
      %p89 = por %p87, %p88
      %p91 = scmp.ne.s32.totalorder %s76, %s90
      %p92 = scmp.eq.s32.totalorder %s24, 0
      %p93 = por %p91, %p92
      %s95 = sadd.s32 %s94, 1
      %p98 = scmp.eq.s32.totalorder %s18, 1
      %p99 = scmp.ne.s32.totalorder %s94, %s96
      %p100 = scmp.eq.s32.totalorder %s18, 0
      %p101 = por %p99, %p100
      %p102 = scmp.ne.s32.totalorder %s94, %s96
      %p103 = scmp.eq.s32.totalorder %s23, 1
      %p104 = por %p102, %p103
      %p105 = scmp.ne.s32.totalorder %s96, %s97
      %p106 = scmp.eq.s32.totalorder %s23, 0
      %p107 = por %p105, %p106
      %p108 = scmp.ne.s32.totalorder %s96, %s97
      %p109 = scmp.eq.s32.totalorder %s24, 1
      %p110 = por %p108, %p109
      %p112 = scmp.ne.s32.totalorder %s97, %s111
      %p113 = scmp.eq.s32.totalorder %s24, 0
      %p114 = por %p112, %p113
      %s116 = sadd.s32 %s115, 1
      %p119 = scmp.eq.s32.totalorder %s18, 1
      %p120 = scmp.ne.s32.totalorder %s115, %s117
      %p121 = scmp.eq.s32.totalorder %s18, 0
      %p122 = por %p120, %p121
      %p123 = scmp.ne.s32.totalorder %s115, %s117
      %p124 = scmp.eq.s32.totalorder %s23, 1
      %p125 = por %p123, %p124
      %p126 = scmp.ne.s32.totalorder %s117, %s118
      %p127 = scmp.eq.s32.totalorder %s23, 0
      %p128 = por %p126, %p127
      %p129 = scmp.ne.s32.totalorder %s117, %s118
      %p130 = scmp.eq.s32.totalorder %s24, 1
      %p131 = por %p129, %p130
      %p133 = scmp.ne.s32.totalorder %s118, %s132
      %p134 = scmp.eq.s32.totalorder %s24, 0
      %p135 = por %p133, %p134
      %s137 = sadd.s32 %s136, 1
      %p140 = scmp.eq.s32.totalorder %s18, 1
      %p141 = scmp.ne.s32.totalorder %s136, %s138
      %p142 = scmp.eq.s32.totalorder %s18, 0
      %p143 = por %p141, %p142
      %p144 = scmp.ne.s32.totalorder %s136, %s138
      %p145 = scmp.eq.s32.totalorder %s23, 1
      %p146 = por %p144, %p145
      %p147 = scmp.ne.s32.totalorder %s138, %s139
      %p148 = scmp.eq.s32.totalorder %s23, 0
      %p149 = por %p147, %p148
      %p150 = scmp.ne.s32.totalorder %s138, %s139
      %p151 = scmp.eq.s32.totalorder %s24, 1
      %p152 = por %p150, %p151
      %p154 = scmp.ne.s32.totalorder %s139, %s153
      %p155 = scmp.eq.s32.totalorder %s24, 0
      %p156 = por %p154, %p155
      %s158 = sadd.s32 %s157, 1
      %p161 = scmp.eq.s32.totalorder %s18, 1
      %p162 = scmp.ne.s32.totalorder %s157, %s159
      %p163 = scmp.eq.s32.totalorder %s18, 0
      %p164 = por %p162, %p163
      %p165 = scmp.ne.s32.totalorder %s157, %s159
      %p166 = scmp.eq.s32.totalorder %s23, 1
      %p167 = por %p165, %p166
      %p168 = scmp.ne.s32.totalorder %s159, %s160
      %p169 = scmp.eq.s32.totalorder %s23, 0
      %p170 = por %p168, %p169
      %p171 = scmp.ne.s32.totalorder %s159, %s160
      %p172 = scmp.eq.s32.totalorder %s24, 1
      %p173 = por %p171, %p172
      %p175 = scmp.ne.s32.totalorder %s160, %s174
      %p176 = scmp.eq.s32.totalorder %s24, 0
      %p177 = por %p175, %p176
      %s179 = sadd.s32 %s178, 1
      %p182 = scmp.eq.s32.totalorder %s18, 1
      %p183 = scmp.ne.s32.totalorder %s178, %s180
      %p184 = scmp.eq.s32.totalorder %s18, 0
      %p185 = por %p183, %p184
      %p186 = scmp.ne.s32.totalorder %s178, %s180
      %p187 = scmp.eq.s32.totalorder %s23, 1
      %p188 = por %p186, %p187
      %p189 = scmp.ne.s32.totalorder %s180, %s181
      %p190 = scmp.eq.s32.totalorder %s23, 0
      %p191 = por %p189, %p190
      %p192 = scmp.ne.s32.totalorder %s180, %s181
      %p193 = scmp.eq.s32.totalorder %s24, 1
      %p194 = por %p192, %p193
      %p196 = scmp.ne.s32.totalorder %s181, %s195
      %p197 = scmp.eq.s32.totalorder %s24, 0
      %p198 = por %p196, %p197
      %s200 = sadd.s32 %s199, 1
      %p203 = scmp.eq.s32.totalorder %s18, 1
      %p204 = scmp.ne.s32.totalorder %s199, %s201
      %p205 = scmp.eq.s32.totalorder %s18, 0
      %p206 = por %p204, %p205
      %p207 = scmp.ne.s32.totalorder %s199, %s201
      %p208 = scmp.eq.s32.totalorder %s23, 1
      %p209 = por %p207, %p208
      %p210 = scmp.ne.s32.totalorder %s201, %s202
      %p211 = scmp.eq.s32.totalorder %s23, 0
      %p212 = por %p210, %p211
      %p213 = scmp.ne.s32.totalorder %s201, %s202
      %p214 = scmp.eq.s32.totalorder %s24, 1
      %p215 = por %p213, %p214
      %p217 = scmp.ne.s32.totalorder %s202, %s216
      %p218 = scmp.eq.s32.totalorder %s24, 0
      %p219 = por %p217, %p218
      %s220 = ssub.s32 %s18, %s25
      %p221 = scmp.eq.s32.totalorder %s220, 0
      %s223 = sadd.s32 %s222, 1
      %s224 = scalar_select %p221, %s222, %s223
      %p227 = pneg %p221
      %p228 = scmp.eq.s32.totalorder %s18, 1
      %p229 = por %p227, %p228
      %p230 = scmp.ne.s32.totalorder %s222, %s225
      %p231 = scmp.eq.s32.totalorder %s18, 0
      %p232 = por %p230, %p231
      %p233 = scmp.ne.s32.totalorder %s222, %s225
      %p234 = scmp.eq.s32.totalorder %s23, 1
      %p235 = por %p233, %p234
      %p236 = scmp.ne.s32.totalorder %s225, %s226
      %p237 = scmp.eq.s32.totalorder %s23, 0
      %p238 = por %p236, %p237
      %p239 = scmp.ne.s32.totalorder %s225, %s226
      %p240 = scmp.eq.s32.totalorder %s24, 1
      %p241 = por %p239, %p240
      %p243 = scmp.ne.s32.totalorder %s226, %s242
      %p244 = scmp.eq.s32.totalorder %s24, 0
      %p245 = por %p243, %p244
      %p246 = scmp.le.s32.totalorder 1, %s18
      %p247 = scmp.lt.s32.totalorder %s18, 3
      %p248 = pnand %p246, %p247
      %p249 = pneg %p248
      // Predicated region
      $region9: #{tpu_custom_call.1} parent=5 // pred_check
        _
      $region10: #{tpu_custom_call.1} parent=5 // pred_check_branch
        %251 = sbr.rel (%p248) target = $region12
      $region11: #{tpu_custom_call.1} parent=5 // pred_region
        %s252 = ssub.s32 %s18, 1
        // Predicated region
        $region13: #{tpu_custom_call.1} parent=11 // pred_check
          %p253 = pneg %p65
        $region14: #{tpu_custom_call.1} parent=11 // pred_check_branch
          %255 = sbr.rel (%p253) target = $region16
        $region15: #{tpu_custom_call.1} parent=11 // pred_region
          _
        $region16: #{tpu_custom_call.1} parent=11 // pred_fallthru
          _
        // Predicated region
        $region17: #{tpu_custom_call.1} parent=11 // pred_check
          %p256 = pneg %p86
        $region18: #{tpu_custom_call.1} parent=11 // pred_check_branch
          %258 = sbr.rel (%p256) target = $region20
        $region19: #{tpu_custom_call.1} parent=11 // pred_region
          _
        $region20: #{tpu_custom_call.1} parent=11 // pred_fallthru
          _
        // Predicated region
        $region21: #{tpu_custom_call.1} parent=11 // pred_check
          %p259 = pneg %p107
        $region22: #{tpu_custom_call.1} parent=11 // pred_check_branch
          %261 = sbr.rel (%p259) target = $region24
        $region23: #{tpu_custom_call.1} parent=11 // pred_region
          _
        $region24: #{tpu_custom_call.1} parent=11 // pred_fallthru
          _
        // Predicated region
        $region25: #{tpu_custom_call.1} parent=11 // pred_check
          %p262 = pneg %p128
        $region26: #{tpu_custom_call.1} parent=11 // pred_check_branch
          %264 = sbr.rel (%p262) target = $region28
        $region27: #{tpu_custom_call.1} parent=11 // pred_region
          _
        $region28: #{tpu_custom_call.1} parent=11 // pred_fallthru
          _
        // Predicated region
        $region29: #{tpu_custom_call.1} parent=11 // pred_check
          %p265 = pneg %p149
        $region30: #{tpu_custom_call.1} parent=11 // pred_check_branch
          %267 = sbr.rel (%p265) target = $region32
        $region31: #{tpu_custom_call.1} parent=11 // pred_region
          _
        $region32: #{tpu_custom_call.1} parent=11 // pred_fallthru
          _
        // Predicated region
        $region33: #{tpu_custom_call.1} parent=11 // pred_check
          %p268 = pneg %p170
        $region34: #{tpu_custom_call.1} parent=11 // pred_check_branch
          %270 = sbr.rel (%p268) target = $region36
        $region35: #{tpu_custom_call.1} parent=11 // pred_region
          _
        $region36: #{tpu_custom_call.1} parent=11 // pred_fallthru
          _
        // Predicated region
        $region37: #{tpu_custom_call.1} parent=11 // pred_check
          %p271 = pneg %p191
        $region38: #{tpu_custom_call.1} parent=11 // pred_check_branch
          %273 = sbr.rel (%p271) target = $region40
        $region39: #{tpu_custom_call.1} parent=11 // pred_region
          _
        $region40: #{tpu_custom_call.1} parent=11 // pred_fallthru
          _
        // Predicated region
        $region41: #{tpu_custom_call.1} parent=11 // pred_check
          %p274 = pneg %p212
        $region42: #{tpu_custom_call.1} parent=11 // pred_check_branch
          %276 = sbr.rel (%p274) target = $region44
        $region43: #{tpu_custom_call.1} parent=11 // pred_region
          _
        $region44: #{tpu_custom_call.1} parent=11 // pred_fallthru
          _
      $region12: #{tpu_custom_call.1} parent=5 // pred_fallthru
        _
      %p277 = scmp.lt.s32.totalorder %s18, 2
      // Predicated region
      $region45: #{tpu_custom_call.1} parent=5 // pred_check
        %p278 = pneg %p277
      $region46: #{tpu_custom_call.1} parent=5 // pred_check_branch
        %280 = sbr.rel (%p278) target = $region48
      $region47: #{tpu_custom_call.1} parent=5 // pred_region
        // Predicated region
        $region49: #{tpu_custom_call.1} parent=47 // pred_check
          %p281 = pneg %p38
        $region50: #{tpu_custom_call.1} parent=47 // pred_check_branch
          %283 = sbr.rel (%p281) target = $region52
        $region51: #{tpu_custom_call.1} parent=47 // pred_region
          %p284 = scmp.lt.s32.totalorder %s18, 1
          %s285 = scalar_select %p284, %s18, 1
          %s286 = smul.addr %s285, 2
          %s287 = smul.addr %s286, 4
          %s288 = scalar_lea.vmem %s0, %s287
        $region52: #{tpu_custom_call.1} parent=47 // pred_fallthru
          _
      $region48: #{tpu_custom_call.1} parent=5 // pred_fallthru
        _
      %p289 = scmp.le.s32.totalorder 1, %s18
      %p290 = scmp.lt.s32.totalorder %s18, 3
      %p291 = pnand %p289, %p290
      %p292 = pneg %p291
      // Predicated region
      $region53: #{tpu_custom_call.1} parent=5 // pred_check
        _
      $region54: #{tpu_custom_call.1} parent=5 // pred_check_branch
        %294 = sbr.rel (%p291) target = $region56
      $region55: #{tpu_custom_call.1} parent=5 // pred_region
        %s295 = ssub.s32 %s18, 1
        %p296 = scmp.lt.s32.totalorder %s23, 1
        %s297 = scalar_select %p296, %s23, 1
        %s298 = smul.addr %s297, 2
        %s299 = smul.addr %s298, 4
        %s300 = scalar_lea.vmem %s0, %s299
        %p301 = pneg %p44
        %p302 = pneg %p41
        %p303 = pneg %p65
        %p304 = pneg %p62
        %p305 = pneg %p86
        %p306 = pneg %p83
        %p307 = pneg %p107
        %p308 = pneg %p104
        %p309 = pneg %p128
        %p310 = pneg %p125
        %p311 = pneg %p149
        %p312 = pneg %p146
        %p313 = pneg %p170
        %p314 = pneg %p167
        %p315 = pneg %p191
        %p316 = pneg %p188
        %p317 = pneg %p212
        %p318 = pneg %p209
        %p319 = pneg %p238
        %p320 = pneg %p235
        %s321 = sand.u32 %s225, 1
        %s322 = scalar_lea.sflag [#allocation3], %s321
        %s323 = sand.u32 %s225, 1
        %s324 = smul.addr %s323, 16
        %s325 = scalar_lea.vmem [#allocation2], %s324
        %p326 = scmp.lt.s32.totalorder %s23, 1
        %s327 = scalar_select %p326, %s23, 1
        %s328 = smul.addr %s327, 2
        %s329 = smul.addr %s328, 4
        %s330 = scalar_lea.vmem %s0, %s329
        %v331 = vlaneseq
        %v332 = vand.u32 %v331, 127
        %v333 = vadd.s32 %v332, 128
        %vm334 = vcmp.lt.s32.totalorder %v332, 0
        %v335 = vsub.s32 0, %v332
        %v336 = vsel %vm334, %v335, %v332
        %v337 = vshrl.u32 %v336, 4
        %v338 = vand.u32 %v336, 15
        %v339 = vsub.s32 0, %v338
        %v340 = vsel %vm334, %v339, %v338
        %vm341 = vcmp.lt.s32.totalorder %v333, 0
        %v342 = vsub.s32 0, %v333
        %v343 = vsel %vm341, %v342, %v333
        %v344 = vshrl.u32 %v343, 4
        %v345 = vand.u32 %v343, 15
        %v346 = vsub.s32 0, %v345
        %v347 = vsel %vm341, %v346, %v345
        %vm348 = vcmp.ne.s32.totalorder %v340, 0
        %vm349 = vcmp.ne.s32.totalorder %v347, 0
        %vm350 = vcmp.lt.s32.totalorder %v340, 0
        %vm351 = vcmp.lt.s32.totalorder %v347, 0
        %vm352 = vmand %vm350, %vm348
        %vm353 = vmand %vm351, %vm349
        %v354 = vadd.s32 %v340, 16
        %v355 = vadd.s32 %v347, 16
        %v356 = vsel %vm352, %v354, %v340
        %v357 = vsel %vm353, %v355, %v347
        %vm358 = vcmp.ne.s32.totalorder %v356, 0
        %vm359 = vcmp.ne.s32.totalorder %v357, 0
        %v360 = vsel %vm358, 1, 0
        %v361 = vsel %vm359, 1, 0
        %v362 = vcvt.s32.f32 %v360
        %v363 = vcvt.s32.f32 %v361
        %vm364 = vcmp.ne.s32.totalorder %v356, 15
        %vm365 = vcmp.ne.s32.totalorder %v357, 15
        %v366 = vsel %vm364, 1, 0
        %v367 = vsel %vm365, 1, 0
        %v368 = vcvt.s32.f32 %v366
        %v369 = vcvt.s32.f32 %v367
        %v370 = vld [vmem:[%s330] sm:$0xff]
        %v371 = vld [vmem:[%s1] sm:$0xff]
        %v373 = vcombine.high %v370, %v370
        %vm374 = vcmask 31744
        %v376 = vsel %vm374, %v371, 0
        %vm378 = vcmask 1043456
        %v379 = vsel %vm378, %v370, 0
        %v381 = vsel %vm378, %v373, 0
        %383 = vmatprep.subr.mxu0 %v381
        %384 = vmatpush1.msra.mxu0 %v379
        %385 = vmatprep.subr.mxu0 0.0
        %386 = vmatpush1.msra.mxu0 0.0
        %387 = vmatprep.subr.mxu0 0.0
        %388 = vmatpush1.msra.mxu0 0.0
        %389 = vmatprep.subr.mxu0 0.0
        %390 = vmatpush1.msra.mxu0 0.0
        %391 = vmatprep.subr.mxu0 0.0
        %392 = vmatpush1.msra.mxu0 0.0
        %393 = vmatprep.subr.mxu0 0.0
        %394 = vmatpush1.msra.mxu0 0.0
        %395 = vmatprep.subr.mxu0 0.0
        %396 = vmatpush1.msra.mxu0 0.0
        %397 = vmatprep.subr.mxu0 0.0
        %398 = vmatpush1.msra.mxu0 0.0
        %399 = vmatprep.subr.mxu0 0.0
        %400 = vmatpush1.msra.mxu0 0.0
        %401 = vmatprep.subr.mxu0 0.0
        %402 = vmatpush1.msra.mxu0 0.0
        %403 = vmatprep.subr.mxu0 0.0
        %404 = vmatpush1.msra.mxu0 0.0
        %405 = vmatprep.subr.mxu0 0.0
        %406 = vmatpush1.msra.mxu0 0.0
        %407 = vmatprep.subr.mxu0 0.0
        %408 = vmatpush1.msra.mxu0 0.0
        %409 = vmatprep.subr.mxu0 0.0
        %410 = vmatpush1.msra.mxu0 0.0
        %411 = vmatprep.subr.mxu0 0.0
        %412 = vmatpush1.msra.mxu0 0.0
        %413 = vmatprep.subr.mxu0 0.0
        %414 = vmatpush1.msra.mxu0 0.0
        %415 = vmatprep.subr.mxu0 0.0
        %416 = vmatpush1.msra.mxu0 0.0
        %417 = vmatprep.subr.mxu0 0.0
        %418 = vmatpush1.msra.mxu0 0.0
        %419 = vmatprep.subr.mxu0 0.0
        %420 = vmatpush1.msra.mxu0 0.0
        %421 = vmatprep.subr.mxu0 0.0
        %422 = vmatpush1.msra.mxu0 0.0
        %423 = vmatprep.subr.mxu0 0.0
        %424 = vmatpush1.msra.mxu0 0.0
        %425 = vmatprep.subr.mxu0 0.0
        %426 = vmatpush1.msra.mxu0 0.0
        %427 = vmatprep.subr.mxu0 0.0
        %428 = vmatpush1.msra.mxu0 0.0
        %429 = vmatprep.subr.mxu0 0.0
        %430 = vmatpush1.msra.mxu0 0.0
        %431 = vmatprep.subr.mxu0 0.0
        %432 = vmatpush1.msra.mxu0 0.0
        %433 = vmatprep.subr.mxu0 0.0
        %434 = vmatpush1.msra.mxu0 0.0
        %435 = vmatprep.subr.mxu0 0.0
        %436 = vmatpush1.msra.mxu0 0.0
        %437 = vmatprep.subr.mxu0 0.0
        %438 = vmatpush1.msra.mxu0 0.0
        %439 = vmatprep.subr.mxu0 0.0
        %440 = vmatpush1.msra.mxu0 0.0
        %441 = vmatprep.subr.mxu0 0.0
        %442 = vmatpush1.msra.mxu0 0.0
        %443 = vmatprep.subr.mxu0 0.0
        %444 = vmatpush1.msra.mxu0 0.0
        %445 = vmatprep.subr.mxu0 0.0
        %446 = vmatpush1.msra.mxu0 0.0
        %447 = vmatprep.mubr.f32.mxu0 0.0
        %448 = vmatmul.mubr.f32.gmra.mrb[0].mxu0 %v376
        %v449 = vpop.f32.mrb[0].mxu0
        %v450 = vadd.f32 0.0, %v449
        %v451 = vpop.f32.mrb[0].mxu0
        %v452 = vadd.f32 0.0, %v451
        %453 = vdwg.mxu0
        %v454 = vld [vmem:[%s2] sm:$0xff]
        %456 = vset.pattern.permute.xlu0 0
        %457 = vperm.xlu0 %456, %v454
        %v458 = vpop.permute.xlu0 %457
        %v460 = vmul.f32 %v450, %v458
        %v461 = vmul.f32 %v452, %v458
        %462 = vset.pattern.permute.xlu0 1
        %463 = vperm.xlu0 %462, %v454
        %v464 = vpop.permute.xlu0 %463
        %v466 = vadd.f32 %v460, %v464
        %v467 = vadd.f32 %v461, %v464
        %v468 = vadd.f32 %v466, 3.0
        %v469 = vadd.f32 %v467, 3.0
        %v470 = vmax.f32 %v468, 0.0
        %v471 = vmax.f32 %v469, 0.0
        %v472 = vmin.f32 %v470, 6.0
        %v473 = vmin.f32 %v471, 6.0
        %v474 = vmul.f32 %v466, %v472
        %v475 = vmul.f32 %v467, %v473
        %v476 = vmul.f32 %v474, 0.16666667
        %v477 = vmul.f32 %v475, 0.16666667
        %v480 = vrot.slane %v476, 4
        %v481 = vrot.slane %v477, 4
        %482 = vrot.lane.b32.xlu0 %v480, 17
        %v483 = vpop.permute.xlu0 %482
        %484 = vrot.lane.b32.xlu0 %v481, 17
        %v485 = vpop.permute.xlu0 %484
        %vm486 = vcmask 138240
        %v487 = vsel %vm486, %v483, %v485
        %v491 = vsel %vm486, 0.0, %v483
        %v492 = vsel %vm486, %v485, 0.0
        %v493 = vmul.f32 %v491, %v362
        %v494 = vmul.f32 %v487, %v363
        %497 = vrot.lane.b32.xlu0 %v368, 2
        %v498 = vpop.permute.xlu0 %497
        %499 = vrot.lane.b32.xlu0 %v369, 2
        %v500 = vpop.permute.xlu0 %499
        %vm501 = vcmask 15360
        %v502 = vsel %vm501, %v498, %v500
        %v506 = vmul.f32 %v491, %v498
        %v507 = vmul.f32 %v487, %v502
        %v508 = vmul.f32 %v492, %v500
        %511 = vrot.lane.b32.xlu0 %v362, 16
        %v512 = vpop.permute.xlu0 %511
        %513 = vrot.lane.b32.xlu0 %v363, 16
        %v514 = vpop.permute.xlu0 %513
        %vm515 = vcmask 130048
        %v516 = vsel %vm515, %v512, %v514
        %v520 = vmul.f32 %v491, %v512
        %v521 = vmul.f32 %v487, %v516
        %v522 = vmul.f32 %v492, %v514
        %523 = vrot.lane.b32.xlu0 %v368, 18
        %v524 = vpop.permute.xlu0 %523
        %525 = vrot.lane.b32.xlu0 %v369, 18
        %v526 = vpop.permute.xlu0 %525
        %vm527 = vcmask 146432
        %v528 = vsel %vm527, %v524, %v526
        %v532 = vmul.f32 %v491, %v524
        %v533 = vmul.f32 %v487, %v528
        %v534 = vmul.f32 %v492, %v526
        %535 = vrot.lane.b32.xlu0 %v362, 32
        %v536 = vpop.permute.xlu0 %535
        %537 = vrot.lane.b32.xlu0 %v363, 32
        %v538 = vpop.permute.xlu0 %537
        %vm539 = vcmask 261120
        %v540 = vsel %vm539, %v536, %v538
        %v544 = vmul.f32 %v491, %v536
        %v545 = vmul.f32 %v487, %v540
        %v546 = vmul.f32 %v492, %v538
        %547 = vrot.lane.b32.xlu0 %v368, 34
        %v548 = vpop.permute.xlu0 %547
        %549 = vrot.lane.b32.xlu0 %v369, 34
        %v550 = vpop.permute.xlu0 %549
        %vm551 = vcmask 277504
        %v552 = vsel %vm551, %v548, %v550
        %v556 = vmul.f32 %v491, %v548
        %v557 = vmul.f32 %v487, %v552
        %v558 = vmul.f32 %v492, %v550
        %v561 = vrot.slane %v491, 4
        %v562 = vrot.slane %v487, 4
        %v563 = vrot.slane %v492, 4
        %564 = vrot.lane.b32.xlu0 %v561, 127
        %v565 = vpop.permute.xlu0 %564
        %566 = vrot.lane.b32.xlu0 %v562, 127
        %v567 = vpop.permute.xlu0 %566
        %568 = vrot.lane.b32.xlu0 %v563, 127
        %v569 = vpop.permute.xlu0 %568
        %vm570 = vcmask 1039360
        %v571 = vsel %vm570, %v565, %v567
        %v572 = vsel %vm570, %v567, %v569
        %578 = vrot.lane.b32.xlu0 %v506, 126
        %v579 = vpop.permute.xlu0 %578
        %580 = vrot.lane.b32.xlu0 %v507, 126
        %v581 = vpop.permute.xlu0 %580
        %582 = vrot.lane.b32.xlu0 %v508, 126
        %v583 = vpop.permute.xlu0 %582
        %vm584 = vcmask 1031168
        %v585 = vsel %vm584, %v579, %v581
        %v586 = vsel %vm584, %v581, %v583
        %v592 = vrot.slane %v520, 4
        %v593 = vrot.slane %v521, 4
        %v594 = vrot.slane %v522, 4
        %595 = vrot.lane.b32.xlu0 %v592, 112
        %v596 = vpop.permute.xlu0 %595
        %597 = vrot.lane.b32.xlu0 %v593, 112
        %v598 = vpop.permute.xlu0 %597
        %599 = vrot.lane.b32.xlu0 %v594, 112
        %v600 = vpop.permute.xlu0 %599
        %vm601 = vcmask 916480
        %v602 = vsel %vm601, %v596, %v598
        %v603 = vsel %vm601, %v598, %v600
        %606 = vrot.lane.b32.xlu0 %v491, 111
        %v607 = vpop.permute.xlu0 %606
        %608 = vrot.lane.b32.xlu0 %v487, 111
        %v609 = vpop.permute.xlu0 %608
        %610 = vrot.lane.b32.xlu0 %v492, 111
        %v611 = vpop.permute.xlu0 %610
        %vm612 = vcmask 908288
        %v613 = vsel %vm612, %v607, %v609
        %v614 = vsel %vm612, %v609, %v611
        %v620 = vrot.slane %v532, 4
        %v621 = vrot.slane %v533, 4
        %v622 = vrot.slane %v534, 4
        %623 = vrot.lane.b32.xlu0 %v620, 110
        %v624 = vpop.permute.xlu0 %623
        %625 = vrot.lane.b32.xlu0 %v621, 110
        %v626 = vpop.permute.xlu0 %625
        %627 = vrot.lane.b32.xlu0 %v622, 110
        %v628 = vpop.permute.xlu0 %627
        %vm629 = vcmask 900096
        %v630 = vsel %vm629, %v624, %v626
        %v631 = vsel %vm629, %v626, %v628
        %637 = vrot.lane.b32.xlu0 %v544, 96
        %v638 = vpop.permute.xlu0 %637
        %639 = vrot.lane.b32.xlu0 %v545, 96
        %v640 = vpop.permute.xlu0 %639
        %641 = vrot.lane.b32.xlu0 %v546, 96
        %v642 = vpop.permute.xlu0 %641
        %vm643 = vcmask 785408
        %v644 = vsel %vm643, %v638, %v640
        %v645 = vsel %vm643, %v640, %v642
        %648 = vrot.lane.b32.xlu0 %v561, 95
        %v649 = vpop.permute.xlu0 %648
        %650 = vrot.lane.b32.xlu0 %v562, 95
        %v651 = vpop.permute.xlu0 %650
        %652 = vrot.lane.b32.xlu0 %v563, 95
        %v653 = vpop.permute.xlu0 %652
        %vm654 = vcmask 777216
        %v655 = vsel %vm654, %v649, %v651
        %v656 = vsel %vm654, %v651, %v653
        %662 = vrot.lane.b32.xlu0 %v556, 94
        %v663 = vpop.permute.xlu0 %662
        %664 = vrot.lane.b32.xlu0 %v557, 94
        %v665 = vpop.permute.xlu0 %664
        %666 = vrot.lane.b32.xlu0 %v558, 94
        %v667 = vpop.permute.xlu0 %666
        %vm668 = vcmask 769024
        %v669 = vsel %vm668, %v663, %v665
        %v670 = vsel %vm668, %v665, %v667
        %v671 = vsel %vm378, %v493, %v571
        %v672 = vsel %vm378, %v494, %v572
        %v673 = vsel %vm378, %v585, %v602
        %v674 = vsel %vm378, %v586, %v603
        %v675 = vsel %vm378, %v613, %v630
        %v676 = vsel %vm378, %v614, %v631
        %v677 = vsel %vm378, %v644, %v655
        %v678 = vsel %vm378, %v645, %v656
        %v679 = vld [vmem:[%s3] sm:$0xf]
        %vm680 = vcmask 293888
        %v682 = vsel %vm680, %v679, 0
        %v684 = vsel %vm378, %v669, 0
        %v686 = vsel %vm378, %v670, 0
        %688 = vmatprep.subr.mxu0 %v672
        %689 = vmatpush1.msra.mxu0 %v671
        %690 = vmatprep.subr.mxu0 %v674
        %691 = vmatpush1.msra.mxu0 %v673
        %692 = vmatprep.subr.mxu0 %v676
        %693 = vmatpush1.msra.mxu0 %v675
        %694 = vmatprep.subr.mxu0 %v678
        %695 = vmatpush1.msra.mxu0 %v677
        %696 = vmatprep.subr.mxu0 %v686
        %697 = vmatpush1.msra.mxu0 %v684
        %698 = vmatprep.subr.mxu0 0.0
        %699 = vmatpush1.msra.mxu0 0.0
        %700 = vmatprep.subr.mxu0 0.0
        %701 = vmatpush1.msra.mxu0 0.0
        %702 = vmatprep.subr.mxu0 0.0
        %703 = vmatpush1.msra.mxu0 0.0
        %704 = vmatprep.subr.mxu0 0.0
        %705 = vmatpush1.msra.mxu0 0.0
        %706 = vmatprep.subr.mxu0 0.0
        %707 = vmatpush1.msra.mxu0 0.0
        %708 = vmatprep.subr.mxu0 0.0
        %709 = vmatpush1.msra.mxu0 0.0
        %710 = vmatprep.subr.mxu0 0.0
        %711 = vmatpush1.msra.mxu0 0.0
        %712 = vmatprep.subr.mxu0 0.0
        %713 = vmatpush1.msra.mxu0 0.0
        %714 = vmatprep.subr.mxu0 0.0
        %715 = vmatpush1.msra.mxu0 0.0
        %716 = vmatprep.subr.mxu0 0.0
        %717 = vmatpush1.msra.mxu0 0.0
        %718 = vmatprep.subr.mxu0 0.0
        %719 = vmatpush1.msra.mxu0 0.0
        %720 = vmatprep.subr.mxu0 0.0
        %721 = vmatpush1.msra.mxu0 0.0
        %722 = vmatprep.subr.mxu0 0.0
        %723 = vmatpush1.msra.mxu0 0.0
        %724 = vmatprep.subr.mxu0 0.0
        %725 = vmatpush1.msra.mxu0 0.0
        %726 = vmatprep.subr.mxu0 0.0
        %727 = vmatpush1.msra.mxu0 0.0
        %728 = vmatprep.subr.mxu0 0.0
        %729 = vmatpush1.msra.mxu0 0.0
        %730 = vmatprep.subr.mxu0 0.0
        %731 = vmatpush1.msra.mxu0 0.0
        %732 = vmatprep.subr.mxu0 0.0
        %733 = vmatpush1.msra.mxu0 0.0
        %734 = vmatprep.subr.mxu0 0.0
        %735 = vmatpush1.msra.mxu0 0.0
        %736 = vmatprep.subr.mxu0 0.0
        %737 = vmatpush1.msra.mxu0 0.0
        %738 = vmatprep.subr.mxu0 0.0
        %739 = vmatpush1.msra.mxu0 0.0
        %740 = vmatprep.subr.mxu0 0.0
        %741 = vmatpush1.msra.mxu0 0.0
        %742 = vmatprep.subr.mxu0 0.0
        %743 = vmatpush1.msra.mxu0 0.0
        %744 = vmatprep.subr.mxu0 0.0
        %745 = vmatpush1.msra.mxu0 0.0
        %746 = vmatprep.subr.mxu0 0.0
        %747 = vmatpush1.msra.mxu0 0.0
        %748 = vmatprep.subr.mxu0 0.0
        %749 = vmatpush1.msra.mxu0 0.0
        %750 = vmatprep.subr.mxu0 0.0
        %751 = vmatpush1.msra.mxu0 0.0
        %752 = vmatprep.mubr.f32.mxu0 0.0
        %753 = vmatmul.mubr.f32.gmra.mrb[0].mxu0 %v682
        %v754 = vpop.f32.mrb[0].mxu0
        %v755 = vadd.f32 0.0, %v754
        %v756 = vpop.f32.mrb[0].mxu0
        %v757 = vadd.f32 0.0, %v756
        %758 = vdwg.mxu0
        %v759 = vld [vmem:[%s4] sm:$0xf]
        %761 = vset.pattern.permute.xlu0 0
        %762 = vperm.xlu0 %761, %v759
        %v763 = vpop.permute.xlu0 %762
        %v765 = vmul.f32 %v755, %v763
        %v766 = vmul.f32 %v757, %v763
        %767 = vset.pattern.permute.xlu0 1
        %768 = vperm.xlu0 %767, %v759
        %v769 = vpop.permute.xlu0 %768
        %v771 = vadd.f32 %v765, %v769
        %v772 = vadd.f32 %v766, %v769
        %v773 = vadd.f32 %v771, 3.0
        %v774 = vadd.f32 %v772, 3.0
        %v775 = vmax.f32 %v773, 0.0
        %v776 = vmax.f32 %v774, 0.0
        %v777 = vmin.f32 %v775, 6.0
        %v778 = vmin.f32 %v776, 6.0
        %v779 = vmul.f32 %v771, %v777
        %v780 = vmul.f32 %v772, %v778
        %v781 = vmul.f32 %v779, 0.16666667
        %v782 = vmul.f32 %v780, 0.16666667
        %785 = vrot.lane.b32.xlu0 %v781, 17
        %v786 = vpop.permute.xlu0 %785
        %787 = vrot.lane.b32.xlu0 %v782, 17
        %v788 = vpop.permute.xlu0 %787
        %v789 = vsel %vm486, %v786, %v788
        %v793 = vsel %vm486, 0.0, %v786
        %v794 = vsel %vm486, %v788, 0.0
        %v795 = vmul.f32 %v793, %v362
        %v796 = vmul.f32 %v789, %v363
        %v797 = vmul.f32 %v793, %v498
        %v798 = vmul.f32 %v789, %v502
        %v799 = vmul.f32 %v794, %v500
        %v800 = vmul.f32 %v793, %v512
        %v801 = vmul.f32 %v789, %v516
        %v802 = vmul.f32 %v794, %v514
        %v803 = vmul.f32 %v793, %v524
        %v804 = vmul.f32 %v789, %v528
        %v805 = vmul.f32 %v794, %v526
        %v806 = vmul.f32 %v793, %v536
        %v807 = vmul.f32 %v789, %v540
        %v808 = vmul.f32 %v794, %v538
        %v809 = vmul.f32 %v793, %v548
        %v810 = vmul.f32 %v789, %v552
        %v811 = vmul.f32 %v794, %v550
        %v814 = vrot.slane %v793, 4
        %v815 = vrot.slane %v789, 4
        %v816 = vrot.slane %v794, 4
        %817 = vrot.lane.b32.xlu0 %v814, 127
        %v818 = vpop.permute.xlu0 %817
        %819 = vrot.lane.b32.xlu0 %v815, 127
        %v820 = vpop.permute.xlu0 %819
        %821 = vrot.lane.b32.xlu0 %v816, 127
        %v822 = vpop.permute.xlu0 %821
        %v823 = vsel %vm570, %v818, %v820
        %v824 = vsel %vm570, %v820, %v822
        %830 = vrot.lane.b32.xlu0 %v797, 126
        %v831 = vpop.permute.xlu0 %830
        %832 = vrot.lane.b32.xlu0 %v798, 126
        %v833 = vpop.permute.xlu0 %832
        %834 = vrot.lane.b32.xlu0 %v799, 126
        %v835 = vpop.permute.xlu0 %834
        %v836 = vsel %vm584, %v831, %v833
        %v837 = vsel %vm584, %v833, %v835
        %v843 = vrot.slane %v800, 4
        %v844 = vrot.slane %v801, 4
        %v845 = vrot.slane %v802, 4
        %846 = vrot.lane.b32.xlu0 %v843, 112
        %v847 = vpop.permute.xlu0 %846
        %848 = vrot.lane.b32.xlu0 %v844, 112
        %v849 = vpop.permute.xlu0 %848
        %850 = vrot.lane.b32.xlu0 %v845, 112
        %v851 = vpop.permute.xlu0 %850
        %v852 = vsel %vm601, %v847, %v849
        %v853 = vsel %vm601, %v849, %v851
        %856 = vrot.lane.b32.xlu0 %v793, 111
        %v857 = vpop.permute.xlu0 %856
        %858 = vrot.lane.b32.xlu0 %v789, 111
        %v859 = vpop.permute.xlu0 %858
        %860 = vrot.lane.b32.xlu0 %v794, 111
        %v861 = vpop.permute.xlu0 %860
        %v862 = vsel %vm612, %v857, %v859
        %v863 = vsel %vm612, %v859, %v861
        %v869 = vrot.slane %v803, 4
        %v870 = vrot.slane %v804, 4
        %v871 = vrot.slane %v805, 4
        %872 = vrot.lane.b32.xlu0 %v869, 110
        %v873 = vpop.permute.xlu0 %872
        %874 = vrot.lane.b32.xlu0 %v870, 110
        %v875 = vpop.permute.xlu0 %874
        %876 = vrot.lane.b32.xlu0 %v871, 110
        %v877 = vpop.permute.xlu0 %876
        %v878 = vsel %vm629, %v873, %v875
        %v879 = vsel %vm629, %v875, %v877
        %885 = vrot.lane.b32.xlu0 %v806, 96
        %v886 = vpop.permute.xlu0 %885
        %887 = vrot.lane.b32.xlu0 %v807, 96
        %v888 = vpop.permute.xlu0 %887
        %889 = vrot.lane.b32.xlu0 %v808, 96
        %v890 = vpop.permute.xlu0 %889
        %v891 = vsel %vm643, %v886, %v888
        %v892 = vsel %vm643, %v888, %v890
        %895 = vrot.lane.b32.xlu0 %v814, 95
        %v896 = vpop.permute.xlu0 %895
        %897 = vrot.lane.b32.xlu0 %v815, 95
        %v898 = vpop.permute.xlu0 %897
        %899 = vrot.lane.b32.xlu0 %v816, 95
        %v900 = vpop.permute.xlu0 %899
        %v901 = vsel %vm654, %v896, %v898
        %v902 = vsel %vm654, %v898, %v900
        %908 = vrot.lane.b32.xlu0 %v809, 94
        %v909 = vpop.permute.xlu0 %908
        %910 = vrot.lane.b32.xlu0 %v810, 94
        %v911 = vpop.permute.xlu0 %910
        %912 = vrot.lane.b32.xlu0 %v811, 94
        %v913 = vpop.permute.xlu0 %912
        %v914 = vsel %vm668, %v909, %v911
        %v915 = vsel %vm668, %v911, %v913
        %v916 = vsel %vm378, %v795, %v823
        %v917 = vsel %vm378, %v796, %v824
        %v918 = vsel %vm378, %v836, %v852
        %v919 = vsel %vm378, %v837, %v853
        %v920 = vsel %vm378, %v862, %v878
        %v921 = vsel %vm378, %v863, %v879
        %v922 = vsel %vm378, %v891, %v901
        %v923 = vsel %vm378, %v892, %v902
        %v924 = vld [vmem:[%s5] sm:$0xf]
        %v926 = vsel %vm680, %v924, 0
        %v928 = vsel %vm378, %v914, 0
        %v930 = vsel %vm378, %v915, 0
        %932 = vmatprep.subr.mxu0 %v917
        %933 = vmatpush1.msra.mxu0 %v916
        %934 = vmatprep.subr.mxu0 %v919
        %935 = vmatpush1.msra.mxu0 %v918
        %936 = vmatprep.subr.mxu0 %v921
        %937 = vmatpush1.msra.mxu0 %v920
        %938 = vmatprep.subr.mxu0 %v923
        %939 = vmatpush1.msra.mxu0 %v922
        %940 = vmatprep.subr.mxu0 %v930
        %941 = vmatpush1.msra.mxu0 %v928
        %942 = vmatprep.subr.mxu0 0.0
        %943 = vmatpush1.msra.mxu0 0.0
        %944 = vmatprep.subr.mxu0 0.0
        %945 = vmatpush1.msra.mxu0 0.0
        %946 = vmatprep.subr.mxu0 0.0
        %947 = vmatpush1.msra.mxu0 0.0
        %948 = vmatprep.subr.mxu0 0.0
        %949 = vmatpush1.msra.mxu0 0.0
        %950 = vmatprep.subr.mxu0 0.0
        %951 = vmatpush1.msra.mxu0 0.0
        %952 = vmatprep.subr.mxu0 0.0
        %953 = vmatpush1.msra.mxu0 0.0
        %954 = vmatprep.subr.mxu0 0.0
        %955 = vmatpush1.msra.mxu0 0.0
        %956 = vmatprep.subr.mxu0 0.0
        %957 = vmatpush1.msra.mxu0 0.0
        %958 = vmatprep.subr.mxu0 0.0
        %959 = vmatpush1.msra.mxu0 0.0
        %960 = vmatprep.subr.mxu0 0.0
        %961 = vmatpush1.msra.mxu0 0.0
        %962 = vmatprep.subr.mxu0 0.0
        %963 = vmatpush1.msra.mxu0 0.0
        %964 = vmatprep.subr.mxu0 0.0
        %965 = vmatpush1.msra.mxu0 0.0
        %966 = vmatprep.subr.mxu0 0.0
        %967 = vmatpush1.msra.mxu0 0.0
        %968 = vmatprep.subr.mxu0 0.0
        %969 = vmatpush1.msra.mxu0 0.0
        %970 = vmatprep.subr.mxu0 0.0
        %971 = vmatpush1.msra.mxu0 0.0
        %972 = vmatprep.subr.mxu0 0.0
        %973 = vmatpush1.msra.mxu0 0.0
        %974 = vmatprep.subr.mxu0 0.0
        %975 = vmatpush1.msra.mxu0 0.0
        %976 = vmatprep.subr.mxu0 0.0
        %977 = vmatpush1.msra.mxu0 0.0
        %978 = vmatprep.subr.mxu0 0.0
        %979 = vmatpush1.msra.mxu0 0.0
        %980 = vmatprep.subr.mxu0 0.0
        %981 = vmatpush1.msra.mxu0 0.0
        %982 = vmatprep.subr.mxu0 0.0
        %983 = vmatpush1.msra.mxu0 0.0
        %984 = vmatprep.subr.mxu0 0.0
        %985 = vmatpush1.msra.mxu0 0.0
        %986 = vmatprep.subr.mxu0 0.0
        %987 = vmatpush1.msra.mxu0 0.0
        %988 = vmatprep.subr.mxu0 0.0
        %989 = vmatpush1.msra.mxu0 0.0
        %990 = vmatprep.subr.mxu0 0.0
        %991 = vmatpush1.msra.mxu0 0.0
        %992 = vmatprep.subr.mxu0 0.0
        %993 = vmatpush1.msra.mxu0 0.0
        %994 = vmatprep.subr.mxu0 0.0
        %995 = vmatpush1.msra.mxu0 0.0
        %996 = vmatprep.mubr.f32.mxu0 0.0
        %997 = vmatmul.mubr.f32.gmra.mrb[0].mxu0 %v926
        %v998 = vpop.f32.mrb[0].mxu0
        %v999 = vadd.f32 0.0, %v998
        %v1000 = vpop.f32.mrb[0].mxu0
        %v1001 = vadd.f32 0.0, %v1000
        %1002 = vdwg.mxu0
        %v1003 = vld [vmem:[%s6] sm:$0xf]
        %1005 = vset.pattern.permute.xlu0 0
        %1006 = vperm.xlu0 %1005, %v1003
        %v1007 = vpop.permute.xlu0 %1006
        %v1009 = vmul.f32 %v999, %v1007
        %v1010 = vmul.f32 %v1001, %v1007
        %1011 = vset.pattern.permute.xlu0 1
        %1012 = vperm.xlu0 %1011, %v1003
        %v1013 = vpop.permute.xlu0 %1012
        %v1015 = vadd.f32 %v1009, %v1013
        %v1016 = vadd.f32 %v1010, %v1013
        %v1017 = vadd.f32 %v1015, 3.0
        %v1018 = vadd.f32 %v1016, 3.0
        %v1019 = vmax.f32 %v1017, 0.0
        %v1020 = vmax.f32 %v1018, 0.0
        %v1021 = vmin.f32 %v1019, 6.0
        %v1022 = vmin.f32 %v1020, 6.0
        %v1023 = vmul.f32 %v1015, %v1021
        %v1024 = vmul.f32 %v1016, %v1022
        %v1025 = vmul.f32 %v1023, 0.16666667
        %v1026 = vmul.f32 %v1024, 0.16666667
        %v1027 = vld [vmem:[%s7] sm:$0xff]
        %vm1028 = vcmask 97280
        %v1030 = vsel %vm1028, %v1027, 0
        %v1033 = vsel %vm378, %v1025, 0
        %v1036 = vsel %vm378, %v1026, 0
        %1038 = vmatprep.subr.mxu0 %v477
        %1039 = vmatpush1.msra.mxu0 %v476
        %1040 = vmatprep.subr.mxu0 %v1036
        %1041 = vmatpush1.msra.mxu0 %v1033
        %1042 = vmatprep.subr.mxu0 0.0
        %1043 = vmatpush1.msra.mxu0 0.0
        %1044 = vmatprep.subr.mxu0 0.0
        %1045 = vmatpush1.msra.mxu0 0.0
        %1046 = vmatprep.subr.mxu0 0.0
        %1047 = vmatpush1.msra.mxu0 0.0
        %1048 = vmatprep.subr.mxu0 0.0
        %1049 = vmatpush1.msra.mxu0 0.0
        %1050 = vmatprep.subr.mxu0 0.0
        %1051 = vmatpush1.msra.mxu0 0.0
        %1052 = vmatprep.subr.mxu0 0.0
        %1053 = vmatpush1.msra.mxu0 0.0
        %1054 = vmatprep.subr.mxu0 0.0
        %1055 = vmatpush1.msra.mxu0 0.0
        %1056 = vmatprep.subr.mxu0 0.0
        %1057 = vmatpush1.msra.mxu0 0.0
        %1058 = vmatprep.subr.mxu0 0.0
        %1059 = vmatpush1.msra.mxu0 0.0
        %1060 = vmatprep.subr.mxu0 0.0
        %1061 = vmatpush1.msra.mxu0 0.0
        %1062 = vmatprep.subr.mxu0 0.0
        %1063 = vmatpush1.msra.mxu0 0.0
        %1064 = vmatprep.subr.mxu0 0.0
        %1065 = vmatpush1.msra.mxu0 0.0
        %1066 = vmatprep.subr.mxu0 0.0
        %1067 = vmatpush1.msra.mxu0 0.0
        %1068 = vmatprep.subr.mxu0 0.0
        %1069 = vmatpush1.msra.mxu0 0.0
        %1070 = vmatprep.subr.mxu0 0.0
        %1071 = vmatpush1.msra.mxu0 0.0
        %1072 = vmatprep.subr.mxu0 0.0
        %1073 = vmatpush1.msra.mxu0 0.0
        %1074 = vmatprep.subr.mxu0 0.0
        %1075 = vmatpush1.msra.mxu0 0.0
        %1076 = vmatprep.subr.mxu0 0.0
        %1077 = vmatpush1.msra.mxu0 0.0
        %1078 = vmatprep.subr.mxu0 0.0
        %1079 = vmatpush1.msra.mxu0 0.0
        %1080 = vmatprep.subr.mxu0 0.0
        %1081 = vmatpush1.msra.mxu0 0.0
        %1082 = vmatprep.subr.mxu0 0.0
        %1083 = vmatpush1.msra.mxu0 0.0
        %1084 = vmatprep.subr.mxu0 0.0
        %1085 = vmatpush1.msra.mxu0 0.0
        %1086 = vmatprep.subr.mxu0 0.0
        %1087 = vmatpush1.msra.mxu0 0.0
        %1088 = vmatprep.subr.mxu0 0.0
        %1089 = vmatpush1.msra.mxu0 0.0
        %1090 = vmatprep.subr.mxu0 0.0
        %1091 = vmatpush1.msra.mxu0 0.0
        %1092 = vmatprep.subr.mxu0 0.0
        %1093 = vmatpush1.msra.mxu0 0.0
        %1094 = vmatprep.subr.mxu0 0.0
        %1095 = vmatpush1.msra.mxu0 0.0
        %1096 = vmatprep.subr.mxu0 0.0
        %1097 = vmatpush1.msra.mxu0 0.0
        %1098 = vmatprep.subr.mxu0 0.0
        %1099 = vmatpush1.msra.mxu0 0.0
        %1100 = vmatprep.subr.mxu0 0.0
        %1101 = vmatpush1.msra.mxu0 0.0
        %1102 = vmatprep.mubr.f32.mxu0 0.0
        %1103 = vmatmul.mubr.f32.gmra.mrb[0].mxu0 %v1030
        %v1104 = vpop.f32.mrb[0].mxu0
        %v1105 = vadd.f32 0.0, %v1104
        %v1106 = vpop.f32.mrb[0].mxu0
        %v1107 = vadd.f32 0.0, %v1106
        %1108 = vdwg.mxu0
        %v1109 = vld [vmem:[%s8] sm:$0xff]
        %1111 = vset.pattern.permute.xlu0 0
        %1112 = vperm.xlu0 %1111, %v1109
        %v1113 = vpop.permute.xlu0 %1112
        %v1115 = vmul.f32 %v1105, %v1113
        %v1116 = vmul.f32 %v1107, %v1113
        %1117 = vset.pattern.permute.xlu0 1
        %1118 = vperm.xlu0 %1117, %v1109
        %v1119 = vpop.permute.xlu0 %1118
        %v1121 = vadd.f32 %v1115, %v1119
        %v1122 = vadd.f32 %v1116, %v1119
        %v1123 = vadd.f32 %v1121, 3.0
        %v1124 = vadd.f32 %v1122, 3.0
        %v1125 = vmax.f32 %v1123, 0.0
        %v1126 = vmax.f32 %v1124, 0.0
        %v1127 = vmin.f32 %v1125, 6.0
        %v1128 = vmin.f32 %v1126, 6.0
        %v1129 = vmul.f32 %v1121, %v1127
        %v1130 = vmul.f32 %v1122, %v1128
        %v1131 = vmul.f32 %v1129, 0.16666667
        %v1132 = vmul.f32 %v1130, 0.16666667
        %1133 = vst [vmem:[%s325] sm:$0xff] %v1131
        %1134 = vst [vmem:[%s325 + $0x8] sm:$0xff] %v1132
        %s1135 = sand.u32 %s225, 1
        %s1136 = scalar_lea.sflag [#allocation3], %s1135
        %s1137 = sand.u32 %s225, 1
        %s1138 = smul.addr %s1137, 16
        %s1139 = scalar_lea.vmem [#allocation2], %s1138
        // Predicated region
        $region57: #{tpu_custom_call.1} parent=55 // pred_check
          %p1140 = pneg %p235
        $region58: #{tpu_custom_call.1} parent=55 // pred_check_branch
          %1142 = sbr.rel (%p1140) target = $region60
        $region59: #{tpu_custom_call.1} parent=55 // pred_region
          %s1144 = ssub.s32 256, 256
          %1145 = vsyncadd %s1136, %s1144
          %s1146 = smul.addr %s23, 2
          %s1147 = smul.addr %s1146, 128
          %s1148 = scalar_lea.hbm %s9, %s1147
          %s1150 = sshll.u32 %s1139, 4
          %s1151 = int_to_ptr.vmem [resolvable:$true] %s1150
          %1153 = dma.vmem_to_hbm [thread:$0]  %s1151, 256, %s1148, %s1136
        $region60: #{tpu_custom_call.1} parent=55 // pred_fallthru
          _
      $region56: #{tpu_custom_call.1} parent=5 // pred_fallthru
        _
      %p1154 = scmp.le.s32.totalorder 2, %s18
      // Predicated region
      $region61: #{tpu_custom_call.1} parent=5 // pred_check
        %p1155 = pneg %p1154
      $region62: #{tpu_custom_call.1} parent=5 // pred_check_branch
        %1157 = sbr.rel (%p1155) target = $region64
      $region63: #{tpu_custom_call.1} parent=5 // pred_region
        %s1158 = ssub.s32 %s18, 2
        // Predicated region
        $region65: #{tpu_custom_call.1} parent=63 // pred_check
          %p1159 = pneg %p241
        $region66: #{tpu_custom_call.1} parent=63 // pred_check_branch
          %1161 = sbr.rel (%p1159) target = $region68
        $region67: #{tpu_custom_call.1} parent=63 // pred_region
          %s1162 = sand.u32 %s226, 1
          %s1163 = scalar_lea.sflag [#allocation3], %s1162
          %s1164 = sand.u32 %s226, 1
          %s1165 = smul.addr %s1164, 16
          %s1166 = scalar_lea.vmem [#allocation2], %s1165
          %1167 = dma.done %s1163, 256
        $region68: #{tpu_custom_call.1} parent=63 // pred_fallthru
          _
      $region64: #{tpu_custom_call.1} parent=5 // pred_fallthru
        _
    $region6: #{tpu_custom_call.1} parent=1 // loop_footer
      %s22 = sadd.s32 1, %s18
    $region7: #{tpu_custom_call.1} parent=1 // loop_footer_branch
      %17 = sbr.rel target = $region3
    $region8: #{tpu_custom_call.1} parent=1 // loop_exit
      _
    %1168 = vsyncpa [#allocation3], 1
    %s1169 = scalar_lea.sflag [#allocation3], 1
    %1170 = vsyncpa %s1169, 1

</llo_original>
